<compile_context>
chip_gen: v7x
topology: tpu7x:2x2x1
jax: 0.10.0
libtpu: 0.0.40
codegen_flags: <defaults>
</compile_context>

<pallas_src>
import jax
import jax.numpy as jnp
from jax.experimental import pallas as pl
from jax.experimental.pallas import tpu as pltpu

BN_EPS = 0.8        # nn.BatchNorm2d(out_channel * 4, 0.8) -> eps = 0.8
PRELU_ALPHA = 0.25  # nn.PReLU() default: one shared parameter, init 0.25
LANE = 128
VMEM_LIMIT = 48 * 1024 * 1024   # <= ~48 MiB: safe on v7x (64 MiB/TC), fine on v5e/v6e


def _pick_packed_tile(mq_rows):
    """Rows of the packed [Mq, PIX*K] matrix per grid step.

    ~512-1024 rows/tile at production sizes (>=85% of HBM roofline in the tiling
    measurements); at toy sizes pick a smaller tile so the multi-tile pipeline /
    megacore path is still exercised.  Always a multiple of 8; the grid is
    cdiv-based with zero-padded rows, so there is no divisibility fallback.
    """
    if mq_rows >= 4096:
        return 1024
    if mq_rows >= 1024:
        return 512
    if mq_rows >= 16:
        return (-(-mq_rows // 2) + 7) // 8 * 8   # ~2 tiles, rounded up to 8
    return 8


# ---------------------------------------------------------------------------
# Pass 1: bias-free conv (packed im2col GEMM) for one row tile; per-tile partial
#         per-column sum / sum-of-squares written to this tile's own output rows
#         ("parallel" grid axis -> both v7x TensorCores usable).
# ---------------------------------------------------------------------------
def _conv_stats_kernel(p_ref, w_ref, sum_ref, sq_ref):
    acc = jnp.dot(p_ref[...], w_ref[...], preferred_element_type=jnp.float32)
    s = jnp.sum(acc, axis=0, keepdims=True)          # (1, Cb)
    q = jnp.sum(acc * acc, axis=0, keepdims=True)    # (1, Cb)
    # Replicate across the 8 sublanes so the output block keeps an (8, 128)-legal
    # shape; the wrapper reads sublane 0 and reduces over tiles.
    sum_ref[...] = jnp.broadcast_to(s, sum_ref.shape)
    sq_ref[...] = jnp.broadcast_to(q, sq_ref.shape)


# ---------------------------------------------------------------------------
# Pass 2: conv recompute + folded BN affine + PReLU; lane-dense packed bf16 store.
# ---------------------------------------------------------------------------
def _conv_bn_prelu_kernel(p_ref, w_ref, scale_ref, shift_ref, alpha_ref, o_ref):
    acc = jnp.dot(p_ref[...], w_ref[...], preferred_element_type=jnp.float32)
    y = acc * scale_ref[...] + shift_ref[...]          # f32 epilogue (v5e-safe)
    alpha = alpha_ref[0, 0]
    o_ref[...] = jnp.where(y > 0.0, y, alpha * y).astype(o_ref.dtype)


def upsample_forward(x_nchw, w_oihw, b, gamma, beta, alpha):
    """PyTorch-equivalent forward.  x_nchw: [N, Cin, H, W] -> [N, Cout, 2H, 2W]."""
    N, Cin, H, W = x_nchw.shape
    C4 = w_oihw.shape[0]
    Cout = C4 // 4
    M = N * H * W
    K = 9 * Cin

    # Pixel-packing factor: pack PIX pixels per 128-lane output row when possible.
    if C4 < LANE and LANE % C4 == 0:
        PIX = LANE // C4
        Cb = LANE                      # = PIX * C4, lane-dense real data
    else:
        PIX = 1
        Cb = ((C4 + LANE - 1) // LANE) * LANE
    Kb = PIX * K

    # ---- wrapper glue: im2col built ONCE in bf16 ----------------------------
    # TODO(synk): in-kernel halo row tiles would avoid materializing 9x activation
    # bytes in HBM at production Cin; for small Cin the patches stream is modest.
    x_nhwc = jnp.transpose(x_nchw, (0, 2, 3, 1)).astype(jnp.bfloat16)
    xp = jnp.pad(x_nhwc, ((0, 0), (1, 1), (1, 1), (0, 0)))
    taps = [xp[:, dy:dy + H, dx:dx + W, :] for dy in range(3) for dx in range(3)]
    patches = jnp.stack(taps, axis=3).reshape(M, K)            # bf16 [M, 9*Cin]

    # ---- tiling: cdiv grid over packed rows, zero-padded tail ---------------
    mq_raw = -(-M // PIX)
    TMP = _pick_packed_tile(mq_raw)
    grid_m = -(-mq_raw // TMP)
    Mq = grid_m * TMP
    Mp = Mq * PIX
    patches = jnp.pad(patches, ((0, Mp - M), (0, 0)))
    p_packed = patches.reshape(Mq, Kb)                         # free row-major view

    # ---- weights: block-diagonal over PIX pixel slots (same MXU cost as the
    #      old 128-lane-padded GEMM, but the output columns are all real data) --
    w_k = jnp.transpose(w_oihw, (2, 3, 1, 0)).reshape(K, C4).astype(jnp.float32)
    w_blk = jnp.kron(jnp.eye(PIX, dtype=jnp.float32), w_k)     # [Kb, PIX*C4]
    w_blk = jnp.pad(w_blk, ((0, 0), (0, Cb - PIX * C4))).astype(jnp.bfloat16)

    # -------- pass 1: bias-free conv + per-tile partial stats (parallel) -----
    psum, psq = pl.pallas_call(
        _conv_stats_kernel,
        out_shape=(jax.ShapeDtypeStruct((grid_m, 8, Cb), jnp.float32),
                   jax.ShapeDtypeStruct((grid_m, 8, Cb), jnp.float32)),
        grid=(grid_m,),
        in_specs=[
            pl.BlockSpec((TMP, Kb), lambda i: (i, 0)),
            pl.BlockSpec((Kb, Cb), lambda i: (0, 0)),
        ],
        out_specs=(pl.BlockSpec((1, 8, Cb), lambda i: (i, 0, 0)),
                   pl.BlockSpec((1, 8, Cb), lambda i: (i, 0, 0))),
        compiler_params=pltpu.CompilerParams(
            dimension_semantics=("parallel",),
            vmem_limit_bytes=VMEM_LIMIT),
    )(p_packed, w_blk)

    # ---- global BN stats -> folded per-channel affine (tiny wrapper math) ----
    sums = psum[:, 0, :PIX * C4].sum(axis=0).reshape(PIX, C4).sum(axis=0)
    sqs = psq[:, 0, :PIX * C4].sum(axis=0).reshape(PIX, C4).sum(axis=0)

    inv_m = 1.0 / float(M)                       # true M: padded zero rows add 0
    mean_nb = sums * inv_m                       # bias-free conv mean
    var = jnp.maximum(sqs * inv_m - mean_nb * mean_nb, 0.0)   # clamp one-pass var
    inv_std = jax.lax.rsqrt(var + BN_EPS)
    b_f = b.astype(jnp.float32)
    mean = mean_nb + b_f                         # conv bias re-added wrapper-side
    scale_c = gamma.astype(jnp.float32) * inv_std
    shift_c = beta.astype(jnp.float32) + (b_f - mean) * scale_c   # bias cancels

    scale_p = jnp.pad(jnp.tile(scale_c, PIX), (0, Cb - PIX * C4)).reshape(1, Cb)
    shift_p = jnp.pad(jnp.tile(shift_c, PIX), (0, Cb - PIX * C4)).reshape(1, Cb)
    a2 = jnp.full((1, 1), alpha, jnp.float32)

    # -------- pass 2: conv recompute + BN affine + PReLU, packed bf16 out -----
    y_packed = pl.pallas_call(
        _conv_bn_prelu_kernel,
        out_shape=jax.ShapeDtypeStruct((Mq, Cb), jnp.bfloat16),
        grid=(grid_m,),
        in_specs=[
            pl.BlockSpec((TMP, Kb), lambda i: (i, 0)),
            pl.BlockSpec((Kb, Cb), lambda i: (0, 0)),
            pl.BlockSpec((1, Cb), lambda i: (0, 0)),
            pl.BlockSpec((1, Cb), lambda i: (0, 0)),
            pl.BlockSpec((1, 1), lambda i: (0, 0),
                         memory_space=pltpu.MemorySpace.SMEM),
        ],
        out_specs=pl.BlockSpec((TMP, Cb), lambda i: (i, 0)),
        compiler_params=pltpu.CompilerParams(
            dimension_semantics=("parallel",),        # independent tiles -> megacore
            vmem_limit_bytes=VMEM_LIMIT),
    )(p_packed, w_blk, scale_p, shift_p, a2)

    # ---- wrapper glue: unpack pixel slots (free reshape) + PixelShuffle(2) ----
    y = y_packed[:, :PIX * C4].reshape(Mp, C4)[:M]
    y = y.reshape(N, H, W, Cout, 2, 2)
    out = jnp.transpose(y, (0, 3, 1, 4, 2, 5)).reshape(N, Cout, 2 * H, 2 * W)
    return out.astype(jnp.float32)


def _reference(x_nchw, w_oihw, b, gamma, beta, alpha):
    """Pure-JAX f32 reference matching PyTorch semantics (training-mode BN)."""
    conv = jax.lax.conv_general_dilated(
        x_nchw, w_oihw, window_strides=(1, 1), padding=((1, 1), (1, 1)),
        dimension_numbers=("NCHW", "OIHW", "NCHW"))
    conv = conv + b[None, :, None, None]
    mean = jnp.mean(conv, axis=(0, 2, 3), keepdims=True)
    var = jnp.mean((conv - mean) ** 2, axis=(0, 2, 3), keepdims=True)
    y = (conv - mean) * jax.lax.rsqrt(var + BN_EPS)
    y = y * gamma[None, :, None, None] + beta[None, :, None, None]
    N, C4, H, W = y.shape
    Cout = C4 // 4
    y = y.reshape(N, Cout, 2, 2, H, W)
    y = jnp.transpose(y, (0, 1, 4, 2, 5, 3)).reshape(N, Cout, 2 * H, 2 * W)
    return jnp.where(y > 0, y, alpha * y)


if __name__ == "__main__":
    in_channel, out_channel = 4, 4
    C4 = out_channel * 4
    N, H, W = 2, 16, 16

    key = jax.random.PRNGKey(0)
    k_w, k_b, k_x = jax.random.split(key, 3)
    w_oihw = jax.random.normal(k_w, (C4, in_channel, 3, 3), jnp.float32) * 0.1
    b = jax.random.normal(k_b, (C4,), jnp.float32) * 0.1
    gamma = jnp.ones((C4,), jnp.float32)   # BatchNorm default weight
    beta = jnp.zeros((C4,), jnp.float32)   # BatchNorm default bias
    alpha = PRELU_ALPHA

    x = jax.random.normal(k_x, (N, in_channel, H, W), jnp.float32)

    out = jax.jit(upsample_forward)(x, w_oihw, b, gamma, beta, alpha)
    out = jax.block_until_ready(out)
    assert out.shape == (N, out_channel, 2 * H, 2 * W), out.shape

    ref = jax.block_until_ready(_reference(x, w_oihw, b, gamma, beta, alpha))
    # bf16 MXU operands + bf16 packed store: compare against the f32 reference at
    # a bf16-appropriate tolerance (errors here are ~1e-2 worst case, eps=0.8 damps).
    if not jnp.allclose(out, ref, rtol=3e-2, atol=3e-2):
        raise AssertionError("Pallas kernel disagrees with reference")

    print("KERNEL_OK")
</pallas_src>

<mosaic_0001>
module attributes {stable_mosaic.version = 11 : i64} {
  func.func @_conv_stats_kernel(%arg0: i32, %arg1: memref<32x288xbf16, #tpu.memory_space<vmem>>, %arg2: memref<288x128xbf16, #tpu.memory_space<vmem>>, %arg3: memref<1x8x128xf32, #tpu.memory_space<vmem>>, %arg4: memref<1x8x128xf32, #tpu.memory_space<vmem>>) attributes {dimension_semantics = [#tpu.dimension_semantics<parallel>], iteration_bounds = array<i64: 2>, scalar_prefetch = 0 : i64, scratch_operands = 0 : i64, tpu.core_type = #tpu.core_type<tc>, window_params = [{transform_indices = @transform_0, window_bounds = array<i64: 32, 288>}, {pipeline_mode = #tpu.pipeline_mode<synchronous>, transform_indices = @transform_1, window_bounds = array<i64: 288, 128>}, {transform_indices = @transform_2, window_bounds = array<i64: 1, 8, 128>}, {transform_indices = @transform_3, window_bounds = array<i64: 1, 8, 128>}]} {
    %c0 = arith.constant 0 : index
    %c0_0 = arith.constant 0 : index
    %0 = vector.load %arg1[%c0, %c0_0] : memref<32x288xbf16, #tpu.memory_space<vmem>>, vector<32x288xbf16>
    %c0_1 = arith.constant 0 : index
    %c0_2 = arith.constant 0 : index
    %1 = vector.load %arg2[%c0_1, %c0_2] : memref<288x128xbf16, #tpu.memory_space<vmem>>, vector<288x128xbf16>
    %cst = arith.constant dense<0.000000e+00> : vector<32x128xf32>
    %2 = tpu.matmul %0, %1, %cst {dimension_numbers = #tpu.dot_dimension_numbers<[1], [0], [0], [1], [0, 0, 1, 1], [], []>} : vector<32x288xbf16>, vector<288x128xbf16>, vector<32x128xf32> -> vector<32x128xf32>
    %cst_3 = arith.constant dense<0.000000e+00> : vector<128xf32>
    %3 = vector.multi_reduction <add>, %2, %cst_3 [0] : vector<32x128xf32> to vector<128xf32>
    %4 = vector.shape_cast %3 : vector<128xf32> to vector<1x128xf32>
    %5 = arith.mulf %2, %2 : vector<32x128xf32>
    %cst_4 = arith.constant dense<0.000000e+00> : vector<128xf32>
    %6 = vector.multi_reduction <add>, %5, %cst_4 [0] : vector<32x128xf32> to vector<128xf32>
    %7 = vector.shape_cast %6 : vector<128xf32> to vector<1x128xf32>
    %8 = vector.shape_cast %4 : vector<1x128xf32> to vector<1x1x128xf32>
    %9 = vector.broadcast %8 : vector<1x1x128xf32> to vector<1x8x128xf32>
    %c0_5 = arith.constant 0 : index
    %c0_6 = arith.constant 0 : index
    %c0_7 = arith.constant 0 : index
    %10 = vector.load %arg3[%c0_5, %c0_6, %c0_7] : memref<1x8x128xf32, #tpu.memory_space<vmem>>, vector<1x8x128xf32>
    tpu.vector_store %arg3[%c0_5, %c0_6, %c0_7], %9 {strides = array<i32>} : memref<1x8x128xf32, #tpu.memory_space<vmem>>, vector<1x8x128xf32>,
    %11 = vector.shape_cast %7 : vector<1x128xf32> to vector<1x1x128xf32>
    %12 = vector.broadcast %11 : vector<1x1x128xf32> to vector<1x8x128xf32>
    %c0_8 = arith.constant 0 : index
    %c0_9 = arith.constant 0 : index
    %c0_10 = arith.constant 0 : index
    %13 = vector.load %arg4[%c0_8, %c0_9, %c0_10] : memref<1x8x128xf32, #tpu.memory_space<vmem>>, vector<1x8x128xf32>
    tpu.vector_store %arg4[%c0_8, %c0_9, %c0_10], %12 {strides = array<i32>} : memref<1x8x128xf32, #tpu.memory_space<vmem>>, vector<1x8x128xf32>,
    return
  }
  func.func @transform_0(%arg0: i32) -> (i32, i32) {
    %c0_i32 = arith.constant 0 : i32
    %c0_i32_0 = arith.constant 0 : i32
    return %arg0, %c0_i32 : i32, i32
  }
  func.func @transform_1(%arg0: i32) -> (i32, i32) {
    %c0_i32 = arith.constant 0 : i32
    %c0_i32_0 = arith.constant 0 : i32
    %c0_i32_1 = arith.constant 0 : i32
    return %c0_i32, %c0_i32_0 : i32, i32
  }
  func.func @transform_2(%arg0: i32) -> (i32, i32, i32) {
    %c0_i32 = arith.constant 0 : i32
    %c0_i32_0 = arith.constant 0 : i32
    %c0_i32_1 = arith.constant 0 : i32
    return %arg0, %c0_i32, %c0_i32_0 : i32, i32, i32
  }
  func.func @transform_3(%arg0: i32) -> (i32, i32, i32) {
    %c0_i32 = arith.constant 0 : i32
    %c0_i32_0 = arith.constant 0 : i32
    %c0_i32_1 = arith.constant 0 : i32
    return %arg0, %c0_i32, %c0_i32_0 : i32, i32, i32
  }
}

module attributes {stable_mosaic.version = 11 : i64} {
  func.func @_conv_bn_prelu_kernel(%arg0: i32, %arg1: memref<32x288xbf16, #tpu.memory_space<vmem>>, %arg2: memref<288x128xbf16, #tpu.memory_space<vmem>>, %arg3: memref<1x128xf32, #tpu.memory_space<vmem>>, %arg4: memref<1x128xf32, #tpu.memory_space<vmem>>, %arg5: memref<1x1xf32, #tpu.memory_space<smem>>, %arg6: memref<32x128xbf16, #tpu.memory_space<vmem>>) attributes {dimension_semantics = [#tpu.dimension_semantics<parallel>], iteration_bounds = array<i64: 2>, scalar_prefetch = 0 : i64, scratch_operands = 0 : i64, tpu.core_type = #tpu.core_type<tc>, window_params = [{transform_indices = @transform_0, window_bounds = array<i64: 32, 288>}, {pipeline_mode = #tpu.pipeline_mode<synchronous>, transform_indices = @transform_1, window_bounds = array<i64: 288, 128>}, {pipeline_mode = #tpu.pipeline_mode<synchronous>, transform_indices = @transform_2, window_bounds = array<i64: 1, 128>}, {pipeline_mode = #tpu.pipeline_mode<synchronous>, transform_indices = @transform_3, window_bounds = array<i64: 1, 128>}, {transform_indices = @transform_4, window_bounds = array<i64: 1, 1>}, {transform_indices = @transform_5, window_bounds = array<i64: 32, 128>}]} {
    %c0 = arith.constant 0 : index
    %c0_0 = arith.constant 0 : index
    %0 = vector.load %arg1[%c0, %c0_0] : memref<32x288xbf16, #tpu.memory_space<vmem>>, vector<32x288xbf16>
    %c0_1 = arith.constant 0 : index
    %c0_2 = arith.constant 0 : index
    %1 = vector.load %arg2[%c0_1, %c0_2] : memref<288x128xbf16, #tpu.memory_space<vmem>>, vector<288x128xbf16>
    %cst = arith.constant dense<0.000000e+00> : vector<32x128xf32>
    %2 = tpu.matmul %0, %1, %cst {dimension_numbers = #tpu.dot_dimension_numbers<[1], [0], [0], [1], [0, 0, 1, 1], [], []>} : vector<32x288xbf16>, vector<288x128xbf16>, vector<32x128xf32> -> vector<32x128xf32>
    %c0_3 = arith.constant 0 : index
    %c0_4 = arith.constant 0 : index
    %3 = vector.load %arg3[%c0_3, %c0_4] : memref<1x128xf32, #tpu.memory_space<vmem>>, vector<1x128xf32>
    %4 = vector.broadcast %3 : vector<1x128xf32> to vector<32x128xf32>
    %5 = arith.mulf %2, %4 : vector<32x128xf32>
    %c0_5 = arith.constant 0 : index
    %c0_6 = arith.constant 0 : index
    %6 = vector.load %arg4[%c0_5, %c0_6] : memref<1x128xf32, #tpu.memory_space<vmem>>, vector<1x128xf32>
    %7 = vector.broadcast %6 : vector<1x128xf32> to vector<32x128xf32>
    %8 = arith.addf %5, %7 : vector<32x128xf32>
    %c0_7 = arith.constant 0 : index
    %c0_8 = arith.constant 0 : index
    %9 = memref.load %arg5[%c0_7, %c0_8] : memref<1x1xf32, #tpu.memory_space<smem>>
    %cst_9 = arith.constant 0.000000e+00 : f32
    %10 = vector.broadcast %cst_9 : f32 to vector<32x128xf32>
    %11 = arith.cmpf ogt, %8, %10 : vector<32x128xf32>
    %12 = vector.broadcast %9 : f32 to vector<32x128xf32>
    %13 = arith.mulf %12, %8 : vector<32x128xf32>
    %14 = arith.select %11, %8, %13 : vector<32x128xi1>, vector<32x128xf32>
    %15 = arith.truncf %14 : vector<32x128xf32> to vector<32x128xbf16>
    %c0_10 = arith.constant 0 : index
    %c0_11 = arith.constant 0 : index
    %16 = vector.load %arg6[%c0_10, %c0_11] : memref<32x128xbf16, #tpu.memory_space<vmem>>, vector<32x128xbf16>
    tpu.vector_store %arg6[%c0_10, %c0_11], %15 {strides = array<i32>} : memref<32x128xbf16, #tpu.memory_space<vmem>>, vector<32x128xbf16>,
    return
  }
  func.func @transform_0(%arg0: i32) -> (i32, i32) {
    %c0_i32 = arith.constant 0 : i32
    %c0_i32_0 = arith.constant 0 : i32
    return %arg0, %c0_i32 : i32, i32
  }
  func.func @transform_1(%arg0: i32) -> (i32, i32) {
    %c0_i32 = arith.constant 0 : i32
    %c0_i32_0 = arith.constant 0 : i32
    %c0_i32_1 = arith.constant 0 : i32
    return %c0_i32, %c0_i32_0 : i32, i32
  }
  func.func @transform_2(%arg0: i32) -> (i32, i32) {
    %c0_i32 = arith.constant 0 : i32
    %c0_i32_0 = arith.constant 0 : i32
    %c0_i32_1 = arith.constant 0 : i32
    return %c0_i32, %c0_i32_0 : i32, i32
  }
  func.func @transform_3(%arg0: i32) -> (i32, i32) {
    %c0_i32 = arith.constant 0 : i32
    %c0_i32_0 = arith.constant 0 : i32
    %c0_i32_1 = arith.constant 0 : i32
    return %c0_i32, %c0_i32_0 : i32, i32
  }
  func.func @transform_4(%arg0: i32) -> (i32, i32) {
    %c0_i32 = arith.constant 0 : i32
    %c0_i32_0 = arith.constant 0 : i32
    %c0_i32_1 = arith.constant 0 : i32
    return %c0_i32, %c0_i32_0 : i32, i32
  }
  func.func @transform_5(%arg0: i32) -> (i32, i32) {
    %c0_i32 = arith.constant 0 : i32
    %c0_i32_0 = arith.constant 0 : i32
    return %arg0, %c0_i32 : i32, i32
  }
}

</mosaic_0001>

<llo_original>
// kernel: mul.4
$region0: #{mul.4}
  %s0 = inlined_call_operand.hbm [shape: f32[3,3,4,16], index: 0, kind: input, shape index: {}]
  %s1 = inlined_call_operand.vmem [shape: f32[36,16], index: 1, kind: output, shape index: {}]
  $region1: #{mul.4} parent=0
    #allocation0 [shape = 'u8[18432]{0}', space=vmem, size = 0x4800, scoped, tag = 'operand span for operand 0']
    #allocation1 [shape = 's32[1]{0}', space=sflag, size = 0x4, scoped, tag = 'scoped memory for mul.4']
    #allocation2 [shape = 'u8[36864]{0}', space=vmem, size = 0x9000, scoped, tag = 'scoped mem for input reshape']
    %2 = vsyncpa [#allocation1], 0
    %s4 = ssub.s32 576, 576
    %5 = vsyncadd [#allocation1], %s4
    %s7 = sshll.u32 [#allocation0], 4
    %s8 = int_to_ptr.vmem [resolvable:$true] %s7
    %10 = dma.hbm_to_vmem [thread:$0]  %s0, 576, %s8, [#allocation1]
    %11 = dma.done [#allocation1], 576
    %s13 = sshllo.u32 0, 4
    %s14 = smul.addr 4, 8
    %s15 = scalar_lea.vmem [#allocation0], %s14
    %v16 = vld [vmem:[%s15] sm:%s13]
    %s17 = scalar_lea.vmem [#allocation2], 64
    %18 = vst [vmem:[%s17] sm:%s13] %v16
    %s19 = smul.addr 4, 7
    %s20 = scalar_lea.vmem [#allocation0], %s19
    %v21 = vld [vmem:[%s20] sm:%s13]
    %s22 = scalar_lea.vmem [#allocation2], 56
    %23 = vst [vmem:[%s22] sm:%s13] %v21
    %s24 = smul.addr 4, 6
    %s25 = scalar_lea.vmem [#allocation0], %s24
    %v26 = vld [vmem:[%s25] sm:%s13]
    %s27 = scalar_lea.vmem [#allocation2], 48
    %28 = vst [vmem:[%s27] sm:%s13] %v26
    %s29 = smul.addr 4, 5
    %s30 = scalar_lea.vmem [#allocation0], %s29
    %v31 = vld [vmem:[%s30] sm:%s13]
    %s32 = scalar_lea.vmem [#allocation2], 40
    %33 = vst [vmem:[%s32] sm:%s13] %v31
    %s34 = smul.addr 4, 4
    %s35 = scalar_lea.vmem [#allocation0], %s34
    %v36 = vld [vmem:[%s35] sm:%s13]
    %s37 = scalar_lea.vmem [#allocation2], 32
    %38 = vst [vmem:[%s37] sm:%s13] %v36
    %s39 = smul.addr 4, 3
    %s40 = scalar_lea.vmem [#allocation0], %s39
    %v41 = vld [vmem:[%s40] sm:%s13]
    %s42 = scalar_lea.vmem [#allocation2], 24
    %43 = vst [vmem:[%s42] sm:%s13] %v41
    %s44 = smul.addr 4, 2
    %s45 = scalar_lea.vmem [#allocation0], %s44
    %v46 = vld [vmem:[%s45] sm:%s13]
    %s47 = scalar_lea.vmem [#allocation2], 16
    %48 = vst [vmem:[%s47] sm:%s13] %v46
    %s49 = scalar_lea.vmem [#allocation0], 4
    %v50 = vld [vmem:[%s49] sm:%s13]
    %s51 = scalar_lea.vmem [#allocation2], 8
    %52 = vst [vmem:[%s51] sm:%s13] %v50
    %v53 = vld [vmem:[#allocation0] sm:%s13]
    %54 = vst [vmem:[#allocation2] sm:%s13] %v53
    %v55 = vld [vmem:[#allocation2] sm:$0xf]
    %vm56 = vcmask 130048
    %57 = vst.msk [vmem:[%s1] sm:$0xf] %vm56, %v55
    %s58 = scalar_lea.vmem [#allocation2], 8
    %v59 = vld [vmem:[%s58] sm:$0xf]
    %vm60 = vcmask 130048
    %s61 = scalar_lea.vmem %s1, 4
    %62 = vst.msk [vmem:[%s61] sm:$0xf] %vm60, %v59
    %s63 = scalar_lea.vmem [#allocation2], 16
    %v64 = vld [vmem:[%s63] sm:$0xf]
    %vm65 = vcmask 130048
    %s66 = scalar_lea.vmem %s1, 8
    %67 = vst.msk [vmem:[%s66] sm:$0xf] %vm65, %v64
    %s68 = scalar_lea.vmem [#allocation2], 24
    %v69 = vld [vmem:[%s68] sm:$0xf]
    %vm70 = vcmask 130048
    %s71 = scalar_lea.vmem %s1, 12
    %72 = vst.msk [vmem:[%s71] sm:$0xf] %vm70, %v69
    %s73 = scalar_lea.vmem [#allocation2], 32
    %v74 = vld [vmem:[%s73] sm:$0xf]
    %vm75 = vcmask 130048
    %s76 = scalar_lea.vmem %s1, 16
    %77 = vst.msk [vmem:[%s76] sm:$0xf] %vm75, %v74
    %s78 = scalar_lea.vmem [#allocation2], 40
    %v79 = vld [vmem:[%s78] sm:$0xf]
    %vm80 = vcmask 130048
    %s81 = scalar_lea.vmem %s1, 20
    %82 = vst.msk [vmem:[%s81] sm:$0xf] %vm80, %v79
    %s83 = scalar_lea.vmem [#allocation2], 48
    %v84 = vld [vmem:[%s83] sm:$0xf]
    %vm85 = vcmask 130048
    %s86 = scalar_lea.vmem %s1, 24
    %87 = vst.msk [vmem:[%s86] sm:$0xf] %vm85, %v84
    %s88 = scalar_lea.vmem [#allocation2], 56
    %v89 = vld [vmem:[%s88] sm:$0xf]
    %vm90 = vcmask 130048
    %s91 = scalar_lea.vmem %s1, 28
    %92 = vst.msk [vmem:[%s91] sm:$0xf] %vm90, %v89
    %s93 = scalar_lea.vmem [#allocation2], 64
    %v94 = vld [vmem:[%s93] sm:$0xf]
    %vm95 = vcmask 130048
    %s96 = scalar_lea.vmem %s1, 32
    %97 = vst.msk [vmem:[%s96] sm:$0xf] %vm95, %v94
    %98 = vsyncpa [#allocation1], 1

// kernel: tile.18
$region0: #{tile.18}
  #allocation0 [shape = 's32[1]{0}', space=sflag, size = 0x4, scoped, tag = 'scoped memory for tile.18']
  %s0 = inlined_call_operand.vmem [shape: f32[16], index: 0, kind: input, shape index: {}]
  %s1 = inlined_call_operand.vmem [shape: f32[8,16], index: 1, kind: output, shape index: {}]
  // Predicated region
  $region2: #{tile.18} parent=0 // pred_check
    _
  $region3: #{tile.18} parent=0 // pred_check_branch
    %3 = sbr.rel (0) target = $region5
  $region4: #{tile.18} parent=0 // pred_region
    _
  $region5: #{tile.18} parent=0 // pred_fallthru
    _
  %v4 = vld [vmem:[%s0] ss:$0 sm:$0xff]
  %5 = vst [vmem:[%s1] sm:$0xff] %v4

// kernel: upsample_forward.2
$region0: #{upsample_forward.2}
  #allocation0 [shape = 'u32[]', space=smem, size = 0x4, offset = 0x4, fixed_abs, tag = 'smem constant byte address 0x4 - core index']
  #allocation1 [shape = 'u32[144,128]{1,0:T(1,128)}', space=vmem, size = 0x12000, scoped, tag = 'internal scratch']
  %s0 = inlined_call_operand.vmem [shape: bf16[64,288], index: 0, kind: input, shape index: {}]
  %s1 = inlined_call_operand.vmem [shape: bf16[288,128], index: 1, kind: input, shape index: {}]
  %s2 = inlined_call_operand.vmem [shape: f32[2,8,128], index: 2, kind: output, shape index: {0}]
  %s3 = inlined_call_operand.vmem [shape: f32[2,8,128], index: 3, kind: output, shape index: {1}]
  %4 = xla_tuple %s2, %s3
  %s5 = sld [smem:[#allocation0]]
  $region49: #{upsample_forward.2} parent=0
    _
  %s7 = ssub.s32 1, %s5
  %s8 = scalar_select 0, %s7, %s5
  loop: start=0, step=1, limit=4
  $region2: #{upsample_forward.2} parent=0 // loop_pre_header
    _
  $region3: #{upsample_forward.2} parent=0 // loop_header
    %s10 = sphi 0, %s14
    %p11 = scmp.ge.s32.totalorder %s10, 4
    %s20 = sphi 0, %s22
    %s23 = sphi 0, %s20
    %s24 = sphi 0, %s23
    %s40 = sphi 0, %s24
    %s44 = sphi 0, %s44
    %s46 = sphi 0, %s44
    %s47 = sphi 0, %s46
    %s61 = sphi 0, %s47
    %s67 = sphi 0, %s69
    %s70 = sphi 0, %s67
    %s71 = sphi 0, %s70
    %s87 = sphi 0, %s71
    %s93 = sphi 0, %s95
    %s96 = sphi 0, %s93
    %s97 = sphi 0, %s96
    %s113 = sphi 0, %s97
  $region4: #{upsample_forward.2} parent=0 // loop_header_branch
    %13 = sbr.rel (%p11) target = $region8
  $region5: #{upsample_forward.2} parent=0 // loop_body
    %s15 = ssub.s32 %s10, 1
    %s16 = ssub.s32 %s10, 2
    %s17 = sadd.s32 %s10, 1
    %s18 = ssub.s32 %s10, %s17
    %p19 = scmp.eq.s32.totalorder %s18, 0
    %s21 = sadd.s32 %s20, 1
    %s22 = scalar_select %p19, %s20, %s21
    %p25 = pneg %p19
    %p26 = scmp.eq.s32.totalorder %s10, 1
    %p27 = por %p25, %p26
    %p28 = scmp.ne.s32.totalorder %s20, %s23
    %p29 = scmp.eq.s32.totalorder %s10, 0
    %p30 = por %p28, %p29
    %p31 = scmp.ne.s32.totalorder %s20, %s23
    %p32 = scmp.eq.s32.totalorder %s15, 1
    %p33 = por %p31, %p32
    %p34 = scmp.ne.s32.totalorder %s23, %s24
    %p35 = scmp.eq.s32.totalorder %s15, 0
    %p36 = por %p34, %p35
    %p37 = scmp.ne.s32.totalorder %s23, %s24
    %p38 = scmp.eq.s32.totalorder %s16, 1
    %p39 = por %p37, %p38
    %p41 = scmp.ne.s32.totalorder %s24, %s40
    %p42 = scmp.eq.s32.totalorder %s16, 0
    %p43 = por %p41, %p42
    %s45 = sadd.s32 %s44, 1
    %p48 = scmp.eq.s32.totalorder %s10, 1
    %p49 = scmp.ne.s32.totalorder %s44, %s46
    %p50 = scmp.eq.s32.totalorder %s10, 0
    %p51 = por %p49, %p50
    %p52 = scmp.ne.s32.totalorder %s44, %s46
    %p53 = scmp.eq.s32.totalorder %s15, 1
    %p54 = por %p52, %p53
    %p55 = scmp.ne.s32.totalorder %s46, %s47
    %p56 = scmp.eq.s32.totalorder %s15, 0
    %p57 = por %p55, %p56
    %p58 = scmp.ne.s32.totalorder %s46, %s47
    %p59 = scmp.eq.s32.totalorder %s16, 1
    %p60 = por %p58, %p59
    %p62 = scmp.ne.s32.totalorder %s47, %s61
    %p63 = scmp.eq.s32.totalorder %s16, 0
    %p64 = por %p62, %p63
    %s65 = ssub.s32 %s10, %s17
    %p66 = scmp.eq.s32.totalorder %s65, 0
    %s68 = sadd.s32 %s67, 1
    %s69 = scalar_select %p66, %s67, %s68
    %p72 = pneg %p66
    %p73 = scmp.eq.s32.totalorder %s10, 1
    %p74 = por %p72, %p73
    %p75 = scmp.ne.s32.totalorder %s67, %s70
    %p76 = scmp.eq.s32.totalorder %s10, 0
    %p77 = por %p75, %p76
    %p78 = scmp.ne.s32.totalorder %s67, %s70
    %p79 = scmp.eq.s32.totalorder %s15, 1
    %p80 = por %p78, %p79
    %p81 = scmp.ne.s32.totalorder %s70, %s71
    %p82 = scmp.eq.s32.totalorder %s15, 0
    %p83 = por %p81, %p82
    %p84 = scmp.ne.s32.totalorder %s70, %s71
    %p85 = scmp.eq.s32.totalorder %s16, 1
    %p86 = por %p84, %p85
    %p88 = scmp.ne.s32.totalorder %s71, %s87
    %p89 = scmp.eq.s32.totalorder %s16, 0
    %p90 = por %p88, %p89
    %s91 = ssub.s32 %s10, %s17
    %p92 = scmp.eq.s32.totalorder %s91, 0
    %s94 = sadd.s32 %s93, 1
    %s95 = scalar_select %p92, %s93, %s94
    %p98 = pneg %p92
    %p99 = scmp.eq.s32.totalorder %s10, 1
    %p100 = por %p98, %p99
    %p101 = scmp.ne.s32.totalorder %s93, %s96
    %p102 = scmp.eq.s32.totalorder %s10, 0
    %p103 = por %p101, %p102
    %p104 = scmp.ne.s32.totalorder %s93, %s96
    %p105 = scmp.eq.s32.totalorder %s15, 1
    %p106 = por %p104, %p105
    %p107 = scmp.ne.s32.totalorder %s96, %s97
    %p108 = scmp.eq.s32.totalorder %s15, 0
    %p109 = por %p107, %p108
    %p110 = scmp.ne.s32.totalorder %s96, %s97
    %p111 = scmp.eq.s32.totalorder %s16, 1
    %p112 = por %p110, %p111
    %p114 = scmp.ne.s32.totalorder %s97, %s113
    %p115 = scmp.eq.s32.totalorder %s16, 0
    %p116 = por %p114, %p115
    %p117 = scmp.le.s32.totalorder 1, %s10
    %p118 = scmp.lt.s32.totalorder %s10, 3
    %p119 = pnand %p117, %p118
    %p120 = pneg %p119
    // Predicated region
    $region9: #{upsample_forward.2} parent=5 // pred_check
      _
    $region10: #{upsample_forward.2} parent=5 // pred_check_branch
      %122 = sbr.rel (%p119) target = $region12
    $region11: #{upsample_forward.2} parent=5 // pred_region
      %s123 = ssub.s32 %s10, 1
      // Predicated region
      $region13: #{upsample_forward.2} parent=11 // pred_check
        %p124 = pneg %p57
      $region14: #{upsample_forward.2} parent=11 // pred_check_branch
        %126 = sbr.rel (%p124) target = $region16
      $region15: #{upsample_forward.2} parent=11 // pred_region
        _
      $region16: #{upsample_forward.2} parent=11 // pred_fallthru
        _
    $region12: #{upsample_forward.2} parent=5 // pred_fallthru
      _
    %p127 = scmp.lt.s32.totalorder %s10, 2
    // Predicated region
    $region17: #{upsample_forward.2} parent=5 // pred_check
      %p128 = pneg %p127
    $region18: #{upsample_forward.2} parent=5 // pred_check_branch
      %130 = sbr.rel (%p128) target = $region20
    $region19: #{upsample_forward.2} parent=5 // pred_region
      // Predicated region
      $region21: #{upsample_forward.2} parent=19 // pred_check
        %p131 = pneg %p30
      $region22: #{upsample_forward.2} parent=19 // pred_check_branch
        %133 = sbr.rel (%p131) target = $region24
      $region23: #{upsample_forward.2} parent=19 // pred_region
        %s134 = smul.u32 4, %s10
        %p135 = scmp.lt.s32.totalorder %s134, 7
        %s136 = scalar_select %p135, %s134, 7
        %s137 = smul.addr %s136, 3
        %s138 = smul.addr %s137, 4
        %s139 = scalar_lea.vmem %s0, %s138
        %s140 = smul.u32 4, %s10
      $region24: #{upsample_forward.2} parent=19 // pred_fallthru
        _
    $region20: #{upsample_forward.2} parent=5 // pred_fallthru
      _
    %p141 = scmp.le.s32.totalorder 1, %s10
    %p142 = scmp.lt.s32.totalorder %s10, 3
    %p143 = pnand %p141, %p142
    %p144 = pneg %p143
    // Predicated region
    $region25: #{upsample_forward.2} parent=5 // pred_check
      _
    $region26: #{upsample_forward.2} parent=5 // pred_check_branch
      %146 = sbr.rel (%p143) target = $region28
    $region27: #{upsample_forward.2} parent=5 // pred_region
      %s147 = ssub.s32 %s10, 1
      %s148 = smul.u32 4, %s15
      %p149 = scmp.lt.s32.totalorder %s148, 7
      %s150 = scalar_select %p149, %s148, 7
      %s151 = smul.addr %s150, 3
      %s152 = smul.addr %s151, 4
      %s153 = scalar_lea.vmem %s0, %s152
      %p154 = pneg %p36
      %p155 = pneg %p33
      %p156 = pneg %p57
      %p157 = pneg %p54
      %p158 = pneg %p83
      %p159 = pneg %p80
      %p160 = scmp.lt.s32.totalorder %s15, 1
      %s161 = scalar_select %p160, %s15, 1
      %s162 = smul.addr %s161, 8
      %s163 = scalar_lea.vmem %s2, %s162
      %p164 = pneg %p109
      %p165 = pneg %p106
      %p166 = scmp.lt.s32.totalorder %s15, 1
      %s167 = scalar_select %p166, %s15, 1
      %s168 = smul.addr %s167, 8
      %s169 = scalar_lea.vmem %s3, %s168
      %s170 = smul.u32 4, %s15
      %p171 = scmp.lt.s32.totalorder %s170, 7
      %s172 = scalar_select %p171, %s170, 7
      %s173 = smul.addr %s172, 3
      %s174 = smul.addr %s173, 4
      %s175 = scalar_lea.vmem %s0, %s174
      %s176 = smul.u32 4, %s15
      %p177 = scmp.lt.s32.totalorder %s15, 1
      %s178 = scalar_select %p177, %s15, 1
      %s179 = smul.addr %s178, 8
      %s180 = scalar_lea.vmem %s2, %s179
      %p181 = scmp.lt.s32.totalorder %s15, 1
      %s182 = scalar_select %p181, %s15, 1
      %s183 = smul.addr %s182, 8
      %s184 = scalar_lea.vmem %s3, %s183
      %v186 = vld [vmem:[%s175] sm:$0xff]
      %v187 = vld [vmem:[%s175 + $0x8] sm:$0xf]
      %v188 = vld [vmem:[%s175 + $0xc] sm:$0xff]
      %v189 = vld [vmem:[%s175 + $0x14] sm:$0xf]
      %v190 = vld [vmem:[%s175 + $0x18] sm:$0xff]
      %v191 = vld [vmem:[%s175 + $0x20] sm:$0xf]
      %v192 = vld [vmem:[%s175 + $0x24] sm:$0xff]
      %v193 = vld [vmem:[%s175 + $0x2c] sm:$0xf]
      %v194 = vld [vmem:[%s1] sm:$0xf]
      %v195 = vld [vmem:[%s1 + $0x4] sm:$0xf]
      %v196 = vld [vmem:[%s1 + $0x8] sm:$0xf]
      %v197 = vld [vmem:[%s1 + $0xc] sm:$0xf]
      %v198 = vld [vmem:[%s1 + $0x10] sm:$0xf]
      %v199 = vld [vmem:[%s1 + $0x14] sm:$0xf]
      %v200 = vld [vmem:[%s1 + $0x18] sm:$0xf]
      %v201 = vld [vmem:[%s1 + $0x1c] sm:$0xf]
      %v202 = vld [vmem:[%s1 + $0x20] sm:$0xf]
      %v203 = vld [vmem:[%s1 + $0x24] sm:$0xf]
      %v204 = vld [vmem:[%s1 + $0x28] sm:$0xf]
      %v205 = vld [vmem:[%s1 + $0x2c] sm:$0xf]
      %v206 = vld [vmem:[%s1 + $0x30] sm:$0xf]
      %v207 = vld [vmem:[%s1 + $0x34] sm:$0xf]
      %v208 = vld [vmem:[%s1 + $0x38] sm:$0xf]
      %v209 = vld [vmem:[%s1 + $0x3c] sm:$0xf]
      %v210 = vld [vmem:[%s1 + $0x40] sm:$0xf]
      %v211 = vld [vmem:[%s1 + $0x44] sm:$0xf]
      %v212 = vld [vmem:[%s1 + $0x48] sm:$0xf]
      %v213 = vld [vmem:[%s1 + $0x4c] sm:$0xf]
      %v214 = vld [vmem:[%s1 + $0x50] sm:$0xf]
      %v215 = vld [vmem:[%s1 + $0x54] sm:$0xf]
      %v216 = vld [vmem:[%s1 + $0x58] sm:$0xf]
      %v217 = vld [vmem:[%s1 + $0x5c] sm:$0xf]
      %v218 = vld [vmem:[%s1 + $0x60] sm:$0xf]
      %v219 = vld [vmem:[%s1 + $0x64] sm:$0xf]
      %v220 = vld [vmem:[%s1 + $0x68] sm:$0xf]
      %v221 = vld [vmem:[%s1 + $0x6c] sm:$0xf]
      %v222 = vld [vmem:[%s1 + $0x70] sm:$0xf]
      %v223 = vld [vmem:[%s1 + $0x74] sm:$0xf]
      %v224 = vld [vmem:[%s1 + $0x78] sm:$0xf]
      %v225 = vld [vmem:[%s1 + $0x7c] sm:$0xf]
      %v226 = vld [vmem:[%s1 + $0x80] sm:$0xf]
      %v227 = vld [vmem:[%s1 + $0x84] sm:$0xf]
      %v228 = vld [vmem:[%s1 + $0x88] sm:$0xf]
      %v229 = vld [vmem:[%s1 + $0x8c] sm:$0xf]
      %v238 = vunpack.c.l.b16 %v186
      %v239 = vunpack.c.h.b16 %v186
      %v240 = vunpack.c.l.b16 %v187
      %v241 = vunpack.c.l.b16 %v188
      %v242 = vunpack.c.h.b16 %v188
      %v243 = vunpack.c.l.b16 %v189
      %v244 = vunpack.c.l.b16 %v190
      %v245 = vunpack.c.h.b16 %v190
      %v246 = vunpack.c.l.b16 %v191
      %v247 = vunpack.c.l.b16 %v192
      %v248 = vunpack.c.h.b16 %v192
      %v249 = vunpack.c.l.b16 %v193
      %v250 = vpack.c.b16 %v241, %v238
      %v251 = vpack.c.b16 %v242, %v239
      %v252 = vpack.c.b16 %v243, %v240
      %v253 = vpack.c.b16 %v247, %v244
      %v254 = vpack.c.b16 %v248, %v245
      %v255 = vpack.c.b16 %v249, %v246
      %v296 = vunpack.c.l.b16 %v194
      %v297 = vunpack.c.l.b16 %v195
      %v298 = vunpack.c.l.b16 %v196
      %v299 = vunpack.c.l.b16 %v197
      %v300 = vunpack.c.l.b16 %v198
      %v301 = vunpack.c.l.b16 %v199
      %v302 = vunpack.c.l.b16 %v200
      %v303 = vunpack.c.l.b16 %v201
      %v304 = vunpack.c.l.b16 %v202
      %v305 = vunpack.c.l.b16 %v203
      %v306 = vunpack.c.l.b16 %v204
      %v307 = vunpack.c.l.b16 %v205
      %v308 = vunpack.c.l.b16 %v206
      %v309 = vunpack.c.l.b16 %v207
      %v310 = vunpack.c.l.b16 %v208
      %v311 = vunpack.c.l.b16 %v209
      %v312 = vunpack.c.l.b16 %v210
      %v313 = vunpack.c.l.b16 %v211
      %v314 = vunpack.c.l.b16 %v212
      %v315 = vunpack.c.l.b16 %v213
      %v316 = vunpack.c.l.b16 %v214
      %v317 = vunpack.c.l.b16 %v215
      %v318 = vunpack.c.l.b16 %v216
      %v319 = vunpack.c.l.b16 %v217
      %v320 = vunpack.c.l.b16 %v218
      %v321 = vunpack.c.l.b16 %v219
      %v322 = vunpack.c.l.b16 %v220
      %v323 = vunpack.c.l.b16 %v221
      %v324 = vunpack.c.l.b16 %v222
      %v325 = vunpack.c.l.b16 %v223
      %v326 = vunpack.c.l.b16 %v224
      %v327 = vunpack.c.l.b16 %v225
      %v328 = vunpack.c.l.b16 %v226
      %v329 = vunpack.c.l.b16 %v227
      %v330 = vunpack.c.l.b16 %v228
      %v331 = vunpack.c.l.b16 %v229
      %v332 = vpack.c.b16 %v297, %v296
      %v333 = vpack.c.b16 %v299, %v298
      %v334 = vpack.c.b16 %v301, %v300
      %v335 = vpack.c.b16 %v303, %v302
      %v336 = vpack.c.b16 %v305, %v304
      %v337 = vpack.c.b16 %v307, %v306
      %v338 = vpack.c.b16 %v309, %v308
      %v339 = vpack.c.b16 %v311, %v310
      %v340 = vpack.c.b16 %v313, %v312
      %v341 = vpack.c.b16 %v315, %v314
      %v342 = vpack.c.b16 %v317, %v316
      %v343 = vpack.c.b16 %v319, %v318
      %v344 = vpack.c.b16 %v321, %v320
      %v345 = vpack.c.b16 %v323, %v322
      %v346 = vpack.c.b16 %v325, %v324
      %v347 = vpack.c.b16 %v327, %v326
      %v348 = vpack.c.b16 %v329, %v328
      %v349 = vpack.c.b16 %v331, %v330
      %vm368 = vcmask 261120
      %v370 = vsel %vm368, %v252, 0
      %v373 = vsel %vm368, %v255, 0
      %375 = vmatprep.subr.bf16.mxu0 0
      %376 = vmatpush1.bf16.msra.mxu0 %v332
      %377 = vmatprep.subr.bf16.mxu0 0
      %378 = vmatpush1.bf16.msra.mxu0 %v333
      %379 = vmatprep.subr.bf16.mxu0 0
      %380 = vmatpush1.bf16.msra.mxu0 %v334
      %381 = vmatprep.subr.bf16.mxu0 0
      %382 = vmatpush1.bf16.msra.mxu0 %v335
      %383 = vmatprep.subr.bf16.mxu0 0
      %384 = vmatpush1.bf16.msra.mxu0 %v336
      %385 = vmatprep.subr.bf16.mxu0 0
      %386 = vmatpush1.bf16.msra.mxu0 %v337
      %387 = vmatprep.subr.bf16.mxu0 0
      %388 = vmatpush1.bf16.msra.mxu0 %v338
      %389 = vmatprep.subr.bf16.mxu0 0
      %390 = vmatpush1.bf16.msra.mxu0 %v339
      %391 = vmatprep.subr.bf16.mxu0 0
      %392 = vmatpush1.bf16.msra.mxu0 %v340
      %393 = vmatprep.subr.bf16.mxu0 0
      %394 = vmatpush1.bf16.msra.mxu0 %v341
      %395 = vmatprep.subr.bf16.mxu0 0
      %396 = vmatpush1.bf16.msra.mxu0 %v342
      %397 = vmatprep.subr.bf16.mxu0 0
      %398 = vmatpush1.bf16.msra.mxu0 %v343
      %399 = vmatprep.subr.bf16.mxu0 0
      %400 = vmatpush1.bf16.msra.mxu0 %v344
      %401 = vmatprep.subr.bf16.mxu0 0
      %402 = vmatpush1.bf16.msra.mxu0 %v345
      %403 = vmatprep.subr.bf16.mxu0 0
      %404 = vmatpush1.bf16.msra.mxu0 %v346
      %405 = vmatprep.subr.bf16.mxu0 0
      %406 = vmatpush1.bf16.msra.mxu0 %v347
      %407 = vmatprep.mubr.bf16.mxu0 %v251
      %408 = vmatmul.mubr.bf16.gmra.mrb[0].mxu0 %v250
      %v409 = vpop.f32.mrb[0].mxu0
      %v410 = vadd.f32 0.0, %v409
      %v411 = vpop.f32.mrb[0].mxu0
      %v412 = vpop.f32.mrb[0].mxu0
      %v413 = vadd.f32 0.0, %v412
      %v414 = vpop.f32.mrb[0].mxu0
      %415 = vmatprep.mubr.bf16.mxu0 %v254
      %416 = vmatmul.mubr.bf16.gmra.mrb[0].mxu0 %v253
      %v417 = vpop.f32.mrb[0].mxu0
      %v418 = vadd.f32 0.0, %v417
      %v419 = vpop.f32.mrb[0].mxu0
      %v420 = vpop.f32.mrb[0].mxu0
      %v421 = vadd.f32 0.0, %v420
      %v422 = vpop.f32.mrb[0].mxu0
      %423 = vdwg.mxu0
      %424 = vmatprep.subr.bf16.mxu0 0
      %425 = vmatpush1.bf16.msra.mxu0 %v348
      %426 = vmatprep.subr.bf16.mxu0 0
      %427 = vmatpush1.bf16.msra.mxu0 %v349
      %428 = vmatprep.subr.bf16.mxu0 0
      %429 = vmatpush1.bf16.msra.mxu0 0
      %430 = vmatprep.subr.bf16.mxu0 0
      %431 = vmatpush1.bf16.msra.mxu0 0
      %432 = vmatprep.subr.bf16.mxu0 0
      %433 = vmatpush1.bf16.msra.mxu0 0
      %434 = vmatprep.subr.bf16.mxu0 0
      %435 = vmatpush1.bf16.msra.mxu0 0
      %436 = vmatprep.subr.bf16.mxu0 0
      %437 = vmatpush1.bf16.msra.mxu0 0
      %438 = vmatprep.subr.bf16.mxu0 0
      %439 = vmatpush1.bf16.msra.mxu0 0
      %440 = vmatprep.subr.bf16.mxu0 0
      %441 = vmatpush1.bf16.msra.mxu0 0
      %442 = vmatprep.subr.bf16.mxu0 0
      %443 = vmatpush1.bf16.msra.mxu0 0
      %444 = vmatprep.subr.bf16.mxu0 0
      %445 = vmatpush1.bf16.msra.mxu0 0
      %446 = vmatprep.subr.bf16.mxu0 0
      %447 = vmatpush1.bf16.msra.mxu0 0
      %448 = vmatprep.subr.bf16.mxu0 0
      %449 = vmatpush1.bf16.msra.mxu0 0
      %450 = vmatprep.subr.bf16.mxu0 0
      %451 = vmatpush1.bf16.msra.mxu0 0
      %452 = vmatprep.subr.bf16.mxu0 0
      %453 = vmatpush1.bf16.msra.mxu0 0
      %454 = vmatprep.subr.bf16.mxu0 0
      %455 = vmatpush1.bf16.msra.mxu0 0
      %456 = vmatprep.mubr.bf16.mxu0 0
      %457 = vmatmul.mubr.bf16.gmra.mrb[0].mxu0 %v370
      %v458 = vpop.f32.mrb[0].mxu0
      %v459 = vadd.f32 %v410, %v458
      %v460 = vpop.f32.mrb[0].mxu0
      %v461 = vpop.f32.mrb[0].mxu0
      %v462 = vadd.f32 %v413, %v461
      %v463 = vpop.f32.mrb[0].mxu0
      %464 = vmatprep.mubr.bf16.mxu0 0
      %465 = vmatmul.mubr.bf16.gmra.mrb[0].mxu0 %v373
      %v466 = vpop.f32.mrb[0].mxu0
      %v467 = vadd.f32 %v418, %v466
      %v468 = vpop.f32.mrb[0].mxu0
      %v469 = vpop.f32.mrb[0].mxu0
      %v470 = vadd.f32 %v421, %v469
      %v471 = vpop.f32.mrb[0].mxu0
      %472 = vdwg.mxu0
      %v473 = vadd.f32 %v459, %v462
      %v474 = vadd.f32 %v473, %v467
      %v475 = vadd.f32 %v474, %v470
      %v476 = vrot.slane %v475, 4
      %v477 = vadd.f32 %v475, %v476
      %v478 = vrot.slane %v477, 2
      %v479 = vadd.f32 %v477, %v478
      %v480 = vrot.slane %v479, 1
      %v481 = vadd.f32 %v479, %v480
      %v482 = vmul.f32 %v459, %v459
      %v483 = vmul.f32 %v462, %v462
      %v484 = vmul.f32 %v467, %v467
      %v485 = vmul.f32 %v470, %v470
      %v486 = vadd.f32 %v482, %v483
      %v487 = vadd.f32 %v486, %v484
      %v488 = vadd.f32 %v487, %v485
      %v489 = vrot.slane %v488, 4
      %v490 = vadd.f32 %v488, %v489
      %v491 = vrot.slane %v490, 2
      %v492 = vadd.f32 %v490, %v491
      %v493 = vrot.slane %v492, 1
      %v494 = vadd.f32 %v492, %v493
      %495 = vst [vmem:[%s180] sm:$0xff] %v481
      %496 = vst [vmem:[%s184] sm:$0xff] %v494
      %p497 = scmp.lt.s32.totalorder %s15, 1
      %s498 = scalar_select %p497, %s15, 1
      %s499 = smul.addr %s498, 8
      %s500 = scalar_lea.vmem %s2, %s499
      %p501 = scmp.lt.s32.totalorder %s15, 1
      %s502 = scalar_select %p501, %s15, 1
      %s503 = smul.addr %s502, 8
      %s504 = scalar_lea.vmem %s3, %s503
      // Predicated region
      $region29: #{upsample_forward.2} parent=27 // pred_check
        %p505 = pneg %p80
      $region30: #{upsample_forward.2} parent=27 // pred_check_branch
        %507 = sbr.rel (%p505) target = $region32
      $region31: #{upsample_forward.2} parent=27 // pred_region
        _
      $region32: #{upsample_forward.2} parent=27 // pred_fallthru
        _
      // Predicated region
      $region33: #{upsample_forward.2} parent=27 // pred_check
        %p508 = pneg %p106
      $region34: #{upsample_forward.2} parent=27 // pred_check_branch
        %510 = sbr.rel (%p508) target = $region36
      $region35: #{upsample_forward.2} parent=27 // pred_region
        _
      $region36: #{upsample_forward.2} parent=27 // pred_fallthru
        _
    $region28: #{upsample_forward.2} parent=5 // pred_fallthru
      _
    %p511 = scmp.le.s32.totalorder 2, %s10
    // Predicated region
    $region37: #{upsample_forward.2} parent=5 // pred_check
      %p512 = pneg %p511
    $region38: #{upsample_forward.2} parent=5 // pred_check_branch
      %514 = sbr.rel (%p512) target = $region40
    $region39: #{upsample_forward.2} parent=5 // pred_region
      %s515 = ssub.s32 %s10, 2
      // Predicated region
      $region41: #{upsample_forward.2} parent=39 // pred_check
        %p516 = pneg %p86
      $region42: #{upsample_forward.2} parent=39 // pred_check_branch
        %518 = sbr.rel (%p516) target = $region44
      $region43: #{upsample_forward.2} parent=39 // pred_region
        %p519 = scmp.lt.s32.totalorder %s16, 1
        %s520 = scalar_select %p519, %s16, 1
        %s521 = smul.addr %s520, 8
        %s522 = scalar_lea.vmem %s2, %s521
      $region44: #{upsample_forward.2} parent=39 // pred_fallthru
        _
      // Predicated region
      $region45: #{upsample_forward.2} parent=39 // pred_check
        %p523 = pneg %p112
      $region46: #{upsample_forward.2} parent=39 // pred_check_branch
        %525 = sbr.rel (%p523) target = $region48
      $region47: #{upsample_forward.2} parent=39 // pred_region
        %p526 = scmp.lt.s32.totalorder %s16, 1
        %s527 = scalar_select %p526, %s16, 1
        %s528 = smul.addr %s527, 8
        %s529 = scalar_lea.vmem %s3, %s528
      $region48: #{upsample_forward.2} parent=39 // pred_fallthru
        _
    $region40: #{upsample_forward.2} parent=5 // pred_fallthru
      _
  $region6: #{upsample_forward.2} parent=0 // loop_footer
    %s14 = sadd.s32 1, %s10
  $region7: #{upsample_forward.2} parent=0 // loop_footer_branch
    %9 = sbr.rel target = $region3
  $region8: #{upsample_forward.2} parent=0 // loop_exit
    _

// kernel: upsample_forward.3
$region0: #{upsample_forward.3}
  #allocation0 [shape = 'u32[]', space=smem, size = 0x4, offset = 0x4, fixed_abs, tag = 'smem constant byte address 0x4 - core index']
  #allocation1 [shape = 'u32[144,128]{1,0:T(1,128)}', space=vmem, size = 0x12000, scoped, tag = 'internal scratch']
  #allocation2 [shape = 'f32[1,1]{1,0:T(1,128)S(6)}', space=smem, size = 0x200, scoped, tag = 'scoped memory for upsample_forward.3']
  %s0 = inlined_call_operand.vmem [shape: bf16[64,288], index: 0, kind: input, shape index: {}]
  %s1 = inlined_call_operand.vmem [shape: bf16[288,128], index: 1, kind: input, shape index: {}]
  %s2 = inlined_call_operand.vmem [shape: f32[1,128], index: 2, kind: input, shape index: {}]
  %s3 = inlined_call_operand.vmem [shape: f32[1,128], index: 3, kind: input, shape index: {}]
  %s4 = inlined_call_operand.<no memory space> [shape: f32[1,1], index: 4, kind: input, shape index: {}]
  %s5 = inlined_call_operand.vmem [shape: bf16[64,128], index: 5, kind: output, shape index: {}]
  %s6 = sld [smem:[#allocation0]]
  $region53: #{upsample_forward.3} parent=0
    _
  %s8 = ssub.s32 1, %s6
  %s9 = scalar_select 0, %s8, %s6
  %10 = sst [smem:[#allocation2]] %s4
  loop: start=0, step=1, limit=4
  $region2: #{upsample_forward.3} parent=0 // loop_pre_header
    _
  $region3: #{upsample_forward.3} parent=0 // loop_header
    %s12 = sphi 0, %s16
    %p13 = scmp.ge.s32.totalorder %s12, 4
    %s22 = sphi 0, %s24
    %s25 = sphi 0, %s22
    %s26 = sphi 0, %s25
    %s42 = sphi 0, %s26
    %s46 = sphi 0, %s46
    %s48 = sphi 0, %s46
    %s49 = sphi 0, %s48
    %s63 = sphi 0, %s49
    %s67 = sphi 0, %s67
    %s69 = sphi 0, %s67
    %s70 = sphi 0, %s69
    %s84 = sphi 0, %s70
    %s88 = sphi 0, %s88
    %s90 = sphi 0, %s88
    %s91 = sphi 0, %s90
    %s105 = sphi 0, %s91
    %s109 = sphi 0, %s109
    %s111 = sphi 0, %s109
    %s112 = sphi 0, %s111
    %s126 = sphi 0, %s112
    %s132 = sphi 0, %s134
    %s135 = sphi 0, %s132
    %s136 = sphi 0, %s135
    %s152 = sphi 0, %s136
  $region4: #{upsample_forward.3} parent=0 // loop_header_branch
    %15 = sbr.rel (%p13) target = $region8
  $region5: #{upsample_forward.3} parent=0 // loop_body
    %s17 = ssub.s32 %s12, 1
    %s18 = ssub.s32 %s12, 2
    %s19 = sadd.s32 %s12, 1
    %s20 = ssub.s32 %s12, %s19
    %p21 = scmp.eq.s32.totalorder %s20, 0
    %s23 = sadd.s32 %s22, 1
    %s24 = scalar_select %p21, %s22, %s23
    %p27 = pneg %p21
    %p28 = scmp.eq.s32.totalorder %s12, 1
    %p29 = por %p27, %p28
    %p30 = scmp.ne.s32.totalorder %s22, %s25
    %p31 = scmp.eq.s32.totalorder %s12, 0
    %p32 = por %p30, %p31
    %p33 = scmp.ne.s32.totalorder %s22, %s25
    %p34 = scmp.eq.s32.totalorder %s17, 1
    %p35 = por %p33, %p34
    %p36 = scmp.ne.s32.totalorder %s25, %s26
    %p37 = scmp.eq.s32.totalorder %s17, 0
    %p38 = por %p36, %p37
    %p39 = scmp.ne.s32.totalorder %s25, %s26
    %p40 = scmp.eq.s32.totalorder %s18, 1
    %p41 = por %p39, %p40
    %p43 = scmp.ne.s32.totalorder %s26, %s42
    %p44 = scmp.eq.s32.totalorder %s18, 0
    %p45 = por %p43, %p44
    %s47 = sadd.s32 %s46, 1
    %p50 = scmp.eq.s32.totalorder %s12, 1
    %p51 = scmp.ne.s32.totalorder %s46, %s48
    %p52 = scmp.eq.s32.totalorder %s12, 0
    %p53 = por %p51, %p52
    %p54 = scmp.ne.s32.totalorder %s46, %s48
    %p55 = scmp.eq.s32.totalorder %s17, 1
    %p56 = por %p54, %p55
    %p57 = scmp.ne.s32.totalorder %s48, %s49
    %p58 = scmp.eq.s32.totalorder %s17, 0
    %p59 = por %p57, %p58
    %p60 = scmp.ne.s32.totalorder %s48, %s49
    %p61 = scmp.eq.s32.totalorder %s18, 1
    %p62 = por %p60, %p61
    %p64 = scmp.ne.s32.totalorder %s49, %s63
    %p65 = scmp.eq.s32.totalorder %s18, 0
    %p66 = por %p64, %p65
    %s68 = sadd.s32 %s67, 1
    %p71 = scmp.eq.s32.totalorder %s12, 1
    %p72 = scmp.ne.s32.totalorder %s67, %s69
    %p73 = scmp.eq.s32.totalorder %s12, 0
    %p74 = por %p72, %p73
    %p75 = scmp.ne.s32.totalorder %s67, %s69
    %p76 = scmp.eq.s32.totalorder %s17, 1
    %p77 = por %p75, %p76
    %p78 = scmp.ne.s32.totalorder %s69, %s70
    %p79 = scmp.eq.s32.totalorder %s17, 0
    %p80 = por %p78, %p79
    %p81 = scmp.ne.s32.totalorder %s69, %s70
    %p82 = scmp.eq.s32.totalorder %s18, 1
    %p83 = por %p81, %p82
    %p85 = scmp.ne.s32.totalorder %s70, %s84
    %p86 = scmp.eq.s32.totalorder %s18, 0
    %p87 = por %p85, %p86
    %s89 = sadd.s32 %s88, 1
    %p92 = scmp.eq.s32.totalorder %s12, 1
    %p93 = scmp.ne.s32.totalorder %s88, %s90
    %p94 = scmp.eq.s32.totalorder %s12, 0
    %p95 = por %p93, %p94
    %p96 = scmp.ne.s32.totalorder %s88, %s90
    %p97 = scmp.eq.s32.totalorder %s17, 1
    %p98 = por %p96, %p97
    %p99 = scmp.ne.s32.totalorder %s90, %s91
    %p100 = scmp.eq.s32.totalorder %s17, 0
    %p101 = por %p99, %p100
    %p102 = scmp.ne.s32.totalorder %s90, %s91
    %p103 = scmp.eq.s32.totalorder %s18, 1
    %p104 = por %p102, %p103
    %p106 = scmp.ne.s32.totalorder %s91, %s105
    %p107 = scmp.eq.s32.totalorder %s18, 0
    %p108 = por %p106, %p107
    %s110 = sadd.s32 %s109, 1
    %p113 = scmp.eq.s32.totalorder %s12, 1
    %p114 = scmp.ne.s32.totalorder %s109, %s111
    %p115 = scmp.eq.s32.totalorder %s12, 0
    %p116 = por %p114, %p115
    %p117 = scmp.ne.s32.totalorder %s109, %s111
    %p118 = scmp.eq.s32.totalorder %s17, 1
    %p119 = por %p117, %p118
    %p120 = scmp.ne.s32.totalorder %s111, %s112
    %p121 = scmp.eq.s32.totalorder %s17, 0
    %p122 = por %p120, %p121
    %p123 = scmp.ne.s32.totalorder %s111, %s112
    %p124 = scmp.eq.s32.totalorder %s18, 1
    %p125 = por %p123, %p124
    %p127 = scmp.ne.s32.totalorder %s112, %s126
    %p128 = scmp.eq.s32.totalorder %s18, 0
    %p129 = por %p127, %p128
    %s130 = ssub.s32 %s12, %s19
    %p131 = scmp.eq.s32.totalorder %s130, 0
    %s133 = sadd.s32 %s132, 1
    %s134 = scalar_select %p131, %s132, %s133
    %p137 = pneg %p131
    %p138 = scmp.eq.s32.totalorder %s12, 1
    %p139 = por %p137, %p138
    %p140 = scmp.ne.s32.totalorder %s132, %s135
    %p141 = scmp.eq.s32.totalorder %s12, 0
    %p142 = por %p140, %p141
    %p143 = scmp.ne.s32.totalorder %s132, %s135
    %p144 = scmp.eq.s32.totalorder %s17, 1
    %p145 = por %p143, %p144
    %p146 = scmp.ne.s32.totalorder %s135, %s136
    %p147 = scmp.eq.s32.totalorder %s17, 0
    %p148 = por %p146, %p147
    %p149 = scmp.ne.s32.totalorder %s135, %s136
    %p150 = scmp.eq.s32.totalorder %s18, 1
    %p151 = por %p149, %p150
    %p153 = scmp.ne.s32.totalorder %s136, %s152
    %p154 = scmp.eq.s32.totalorder %s18, 0
    %p155 = por %p153, %p154
    %p156 = scmp.le.s32.totalorder 1, %s12
    %p157 = scmp.lt.s32.totalorder %s12, 3
    %p158 = pnand %p156, %p157
    %p159 = pneg %p158
    // Predicated region
    $region9: #{upsample_forward.3} parent=5 // pred_check
      _
    $region10: #{upsample_forward.3} parent=5 // pred_check_branch
      %161 = sbr.rel (%p158) target = $region12
    $region11: #{upsample_forward.3} parent=5 // pred_region
      %s162 = ssub.s32 %s12, 1
      // Predicated region
      $region13: #{upsample_forward.3} parent=11 // pred_check
        %p163 = pneg %p59
      $region14: #{upsample_forward.3} parent=11 // pred_check_branch
        %165 = sbr.rel (%p163) target = $region16
      $region15: #{upsample_forward.3} parent=11 // pred_region
        _
      $region16: #{upsample_forward.3} parent=11 // pred_fallthru
        _
      // Predicated region
      $region17: #{upsample_forward.3} parent=11 // pred_check
        %p166 = pneg %p80
      $region18: #{upsample_forward.3} parent=11 // pred_check_branch
        %168 = sbr.rel (%p166) target = $region20
      $region19: #{upsample_forward.3} parent=11 // pred_region
        _
      $region20: #{upsample_forward.3} parent=11 // pred_fallthru
        _
      // Predicated region
      $region21: #{upsample_forward.3} parent=11 // pred_check
        %p169 = pneg %p101
      $region22: #{upsample_forward.3} parent=11 // pred_check_branch
        %171 = sbr.rel (%p169) target = $region24
      $region23: #{upsample_forward.3} parent=11 // pred_region
        _
      $region24: #{upsample_forward.3} parent=11 // pred_fallthru
        _
      // Predicated region
      $region25: #{upsample_forward.3} parent=11 // pred_check
        %p172 = pneg %p122
      $region26: #{upsample_forward.3} parent=11 // pred_check_branch
        %174 = sbr.rel (%p172) target = $region28
      $region27: #{upsample_forward.3} parent=11 // pred_region
        _
      $region28: #{upsample_forward.3} parent=11 // pred_fallthru
        _
    $region12: #{upsample_forward.3} parent=5 // pred_fallthru
      _
    %p175 = scmp.lt.s32.totalorder %s12, 2
    // Predicated region
    $region29: #{upsample_forward.3} parent=5 // pred_check
      %p176 = pneg %p175
    $region30: #{upsample_forward.3} parent=5 // pred_check_branch
      %178 = sbr.rel (%p176) target = $region32
    $region31: #{upsample_forward.3} parent=5 // pred_region
      // Predicated region
      $region33: #{upsample_forward.3} parent=31 // pred_check
        %p179 = pneg %p32
      $region34: #{upsample_forward.3} parent=31 // pred_check_branch
        %181 = sbr.rel (%p179) target = $region36
      $region35: #{upsample_forward.3} parent=31 // pred_region
        %s182 = smul.u32 4, %s12
        %p183 = scmp.lt.s32.totalorder %s182, 7
        %s184 = scalar_select %p183, %s182, 7
        %s185 = smul.addr %s184, 3
        %s186 = smul.addr %s185, 4
        %s187 = scalar_lea.vmem %s0, %s186
        %s188 = smul.u32 4, %s12
      $region36: #{upsample_forward.3} parent=31 // pred_fallthru
        _
    $region32: #{upsample_forward.3} parent=5 // pred_fallthru
      _
    %p189 = scmp.le.s32.totalorder 1, %s12
    %p190 = scmp.lt.s32.totalorder %s12, 3
    %p191 = pnand %p189, %p190
    %p192 = pneg %p191
    // Predicated region
    $region37: #{upsample_forward.3} parent=5 // pred_check
      _
    $region38: #{upsample_forward.3} parent=5 // pred_check_branch
      %194 = sbr.rel (%p191) target = $region40
    $region39: #{upsample_forward.3} parent=5 // pred_region
      %s195 = ssub.s32 %s12, 1
      %s196 = smul.u32 4, %s17
      %p197 = scmp.lt.s32.totalorder %s196, 7
      %s198 = scalar_select %p197, %s196, 7
      %s199 = smul.addr %s198, 3
      %s200 = smul.addr %s199, 4
      %s201 = scalar_lea.vmem %s0, %s200
      %p202 = pneg %p38
      %p203 = pneg %p35
      %p204 = pneg %p59
      %p205 = pneg %p56
      %p206 = pneg %p80
      %p207 = pneg %p77
      %p208 = pneg %p101
      %p209 = pneg %p98
      %p210 = pneg %p122
      %p211 = pneg %p119
      %p212 = pneg %p148
      %p213 = pneg %p145
      %s214 = smul.u32 4, %s17
      %p215 = scmp.lt.s32.totalorder %s214, 7
      %s216 = scalar_select %p215, %s214, 7
      %s217 = smul.addr %s216, 4
      %s218 = scalar_lea.vmem %s5, %s217
      %s219 = smul.u32 4, %s17
      %p220 = scmp.lt.s32.totalorder %s219, 7
      %s221 = scalar_select %p220, %s219, 7
      %s222 = smul.addr %s221, 3
      %s223 = smul.addr %s222, 4
      %s224 = scalar_lea.vmem %s0, %s223
      %s225 = smul.u32 4, %s17
      %s226 = smul.u32 4, %s17
      %p227 = scmp.lt.s32.totalorder %s226, 7
      %s228 = scalar_select %p227, %s226, 7
      %s229 = smul.addr %s228, 4
      %s230 = scalar_lea.vmem %s5, %s229
      %s231 = smul.u32 4, %s17
      %v233 = vld [vmem:[%s224] sm:$0xff]
      %v234 = vld [vmem:[%s224 + $0x8] sm:$0xf]
      %v235 = vld [vmem:[%s224 + $0xc] sm:$0xff]
      %v236 = vld [vmem:[%s224 + $0x14] sm:$0xf]
      %v237 = vld [vmem:[%s224 + $0x18] sm:$0xff]
      %v238 = vld [vmem:[%s224 + $0x20] sm:$0xf]
      %v239 = vld [vmem:[%s224 + $0x24] sm:$0xff]
      %v240 = vld [vmem:[%s224 + $0x2c] sm:$0xf]
      %v241 = vld [vmem:[%s1] sm:$0xf]
      %v242 = vld [vmem:[%s1 + $0x4] sm:$0xf]
      %v243 = vld [vmem:[%s1 + $0x8] sm:$0xf]
      %v244 = vld [vmem:[%s1 + $0xc] sm:$0xf]
      %v245 = vld [vmem:[%s1 + $0x10] sm:$0xf]
      %v246 = vld [vmem:[%s1 + $0x14] sm:$0xf]
      %v247 = vld [vmem:[%s1 + $0x18] sm:$0xf]
      %v248 = vld [vmem:[%s1 + $0x1c] sm:$0xf]
      %v249 = vld [vmem:[%s1 + $0x20] sm:$0xf]
      %v250 = vld [vmem:[%s1 + $0x24] sm:$0xf]
      %v251 = vld [vmem:[%s1 + $0x28] sm:$0xf]
      %v252 = vld [vmem:[%s1 + $0x2c] sm:$0xf]
      %v253 = vld [vmem:[%s1 + $0x30] sm:$0xf]
      %v254 = vld [vmem:[%s1 + $0x34] sm:$0xf]
      %v255 = vld [vmem:[%s1 + $0x38] sm:$0xf]
      %v256 = vld [vmem:[%s1 + $0x3c] sm:$0xf]
      %v257 = vld [vmem:[%s1 + $0x40] sm:$0xf]
      %v258 = vld [vmem:[%s1 + $0x44] sm:$0xf]
      %v259 = vld [vmem:[%s1 + $0x48] sm:$0xf]
      %v260 = vld [vmem:[%s1 + $0x4c] sm:$0xf]
      %v261 = vld [vmem:[%s1 + $0x50] sm:$0xf]
      %v262 = vld [vmem:[%s1 + $0x54] sm:$0xf]
      %v263 = vld [vmem:[%s1 + $0x58] sm:$0xf]
      %v264 = vld [vmem:[%s1 + $0x5c] sm:$0xf]
      %v265 = vld [vmem:[%s1 + $0x60] sm:$0xf]
      %v266 = vld [vmem:[%s1 + $0x64] sm:$0xf]
      %v267 = vld [vmem:[%s1 + $0x68] sm:$0xf]
      %v268 = vld [vmem:[%s1 + $0x6c] sm:$0xf]
      %v269 = vld [vmem:[%s1 + $0x70] sm:$0xf]
      %v270 = vld [vmem:[%s1 + $0x74] sm:$0xf]
      %v271 = vld [vmem:[%s1 + $0x78] sm:$0xf]
      %v272 = vld [vmem:[%s1 + $0x7c] sm:$0xf]
      %v273 = vld [vmem:[%s1 + $0x80] sm:$0xf]
      %v274 = vld [vmem:[%s1 + $0x84] sm:$0xf]
      %v275 = vld [vmem:[%s1 + $0x88] sm:$0xf]
      %v276 = vld [vmem:[%s1 + $0x8c] sm:$0xf]
      %v285 = vunpack.c.l.b16 %v233
      %v286 = vunpack.c.h.b16 %v233
      %v287 = vunpack.c.l.b16 %v234
      %v288 = vunpack.c.l.b16 %v235
      %v289 = vunpack.c.h.b16 %v235
      %v290 = vunpack.c.l.b16 %v236
      %v291 = vunpack.c.l.b16 %v237
      %v292 = vunpack.c.h.b16 %v237
      %v293 = vunpack.c.l.b16 %v238
      %v294 = vunpack.c.l.b16 %v239
      %v295 = vunpack.c.h.b16 %v239
      %v296 = vunpack.c.l.b16 %v240
      %v297 = vpack.c.b16 %v288, %v285
      %v298 = vpack.c.b16 %v289, %v286
      %v299 = vpack.c.b16 %v290, %v287
      %v300 = vpack.c.b16 %v294, %v291
      %v301 = vpack.c.b16 %v295, %v292
      %v302 = vpack.c.b16 %v296, %v293
      %v343 = vunpack.c.l.b16 %v241
      %v344 = vunpack.c.l.b16 %v242
      %v345 = vunpack.c.l.b16 %v243
      %v346 = vunpack.c.l.b16 %v244
      %v347 = vunpack.c.l.b16 %v245
      %v348 = vunpack.c.l.b16 %v246
      %v349 = vunpack.c.l.b16 %v247
      %v350 = vunpack.c.l.b16 %v248
      %v351 = vunpack.c.l.b16 %v249
      %v352 = vunpack.c.l.b16 %v250
      %v353 = vunpack.c.l.b16 %v251
      %v354 = vunpack.c.l.b16 %v252
      %v355 = vunpack.c.l.b16 %v253
      %v356 = vunpack.c.l.b16 %v254
      %v357 = vunpack.c.l.b16 %v255
      %v358 = vunpack.c.l.b16 %v256
      %v359 = vunpack.c.l.b16 %v257
      %v360 = vunpack.c.l.b16 %v258
      %v361 = vunpack.c.l.b16 %v259
      %v362 = vunpack.c.l.b16 %v260
      %v363 = vunpack.c.l.b16 %v261
      %v364 = vunpack.c.l.b16 %v262
      %v365 = vunpack.c.l.b16 %v263
      %v366 = vunpack.c.l.b16 %v264
      %v367 = vunpack.c.l.b16 %v265
      %v368 = vunpack.c.l.b16 %v266
      %v369 = vunpack.c.l.b16 %v267
      %v370 = vunpack.c.l.b16 %v268
      %v371 = vunpack.c.l.b16 %v269
      %v372 = vunpack.c.l.b16 %v270
      %v373 = vunpack.c.l.b16 %v271
      %v374 = vunpack.c.l.b16 %v272
      %v375 = vunpack.c.l.b16 %v273
      %v376 = vunpack.c.l.b16 %v274
      %v377 = vunpack.c.l.b16 %v275
      %v378 = vunpack.c.l.b16 %v276
      %v379 = vpack.c.b16 %v344, %v343
      %v380 = vpack.c.b16 %v346, %v345
      %v381 = vpack.c.b16 %v348, %v347
      %v382 = vpack.c.b16 %v350, %v349
      %v383 = vpack.c.b16 %v352, %v351
      %v384 = vpack.c.b16 %v354, %v353
      %v385 = vpack.c.b16 %v356, %v355
      %v386 = vpack.c.b16 %v358, %v357
      %v387 = vpack.c.b16 %v360, %v359
      %v388 = vpack.c.b16 %v362, %v361
      %v389 = vpack.c.b16 %v364, %v363
      %v390 = vpack.c.b16 %v366, %v365
      %v391 = vpack.c.b16 %v368, %v367
      %v392 = vpack.c.b16 %v370, %v369
      %v393 = vpack.c.b16 %v372, %v371
      %v394 = vpack.c.b16 %v374, %v373
      %v395 = vpack.c.b16 %v376, %v375
      %v396 = vpack.c.b16 %v378, %v377
      %vm415 = vcmask 261120
      %v417 = vsel %vm415, %v299, 0
      %v420 = vsel %vm415, %v302, 0
      %422 = vmatprep.subr.bf16.mxu0 0
      %423 = vmatpush1.bf16.msra.mxu0 %v379
      %424 = vmatprep.subr.bf16.mxu0 0
      %425 = vmatpush1.bf16.msra.mxu0 %v380
      %426 = vmatprep.subr.bf16.mxu0 0
      %427 = vmatpush1.bf16.msra.mxu0 %v381
      %428 = vmatprep.subr.bf16.mxu0 0
      %429 = vmatpush1.bf16.msra.mxu0 %v382
      %430 = vmatprep.subr.bf16.mxu0 0
      %431 = vmatpush1.bf16.msra.mxu0 %v383
      %432 = vmatprep.subr.bf16.mxu0 0
      %433 = vmatpush1.bf16.msra.mxu0 %v384
      %434 = vmatprep.subr.bf16.mxu0 0
      %435 = vmatpush1.bf16.msra.mxu0 %v385
      %436 = vmatprep.subr.bf16.mxu0 0
      %437 = vmatpush1.bf16.msra.mxu0 %v386
      %438 = vmatprep.subr.bf16.mxu0 0
      %439 = vmatpush1.bf16.msra.mxu0 %v387
      %440 = vmatprep.subr.bf16.mxu0 0
      %441 = vmatpush1.bf16.msra.mxu0 %v388
      %442 = vmatprep.subr.bf16.mxu0 0
      %443 = vmatpush1.bf16.msra.mxu0 %v389
      %444 = vmatprep.subr.bf16.mxu0 0
      %445 = vmatpush1.bf16.msra.mxu0 %v390
      %446 = vmatprep.subr.bf16.mxu0 0
      %447 = vmatpush1.bf16.msra.mxu0 %v391
      %448 = vmatprep.subr.bf16.mxu0 0
      %449 = vmatpush1.bf16.msra.mxu0 %v392
      %450 = vmatprep.subr.bf16.mxu0 0
      %451 = vmatpush1.bf16.msra.mxu0 %v393
      %452 = vmatprep.subr.bf16.mxu0 0
      %453 = vmatpush1.bf16.msra.mxu0 %v394
      %454 = vmatprep.mubr.bf16.mxu0 %v298
      %455 = vmatmul.mubr.bf16.gmra.mrb[0].mxu0 %v297
      %v456 = vpop.f32.mrb[0].mxu0
      %v457 = vadd.f32 0.0, %v456
      %v458 = vpop.f32.mrb[0].mxu0
      %v459 = vpop.f32.mrb[0].mxu0
      %v460 = vadd.f32 0.0, %v459
      %v461 = vpop.f32.mrb[0].mxu0
      %462 = vmatprep.mubr.bf16.mxu0 %v301
      %463 = vmatmul.mubr.bf16.gmra.mrb[0].mxu0 %v300
      %v464 = vpop.f32.mrb[0].mxu0
      %v465 = vadd.f32 0.0, %v464
      %v466 = vpop.f32.mrb[0].mxu0
      %v467 = vpop.f32.mrb[0].mxu0
      %v468 = vadd.f32 0.0, %v467
      %v469 = vpop.f32.mrb[0].mxu0
      %470 = vdwg.mxu0
      %471 = vmatprep.subr.bf16.mxu0 0
      %472 = vmatpush1.bf16.msra.mxu0 %v395
      %473 = vmatprep.subr.bf16.mxu0 0
      %474 = vmatpush1.bf16.msra.mxu0 %v396
      %475 = vmatprep.subr.bf16.mxu0 0
      %476 = vmatpush1.bf16.msra.mxu0 0
      %477 = vmatprep.subr.bf16.mxu0 0
      %478 = vmatpush1.bf16.msra.mxu0 0
      %479 = vmatprep.subr.bf16.mxu0 0
      %480 = vmatpush1.bf16.msra.mxu0 0
      %481 = vmatprep.subr.bf16.mxu0 0
      %482 = vmatpush1.bf16.msra.mxu0 0
      %483 = vmatprep.subr.bf16.mxu0 0
      %484 = vmatpush1.bf16.msra.mxu0 0
      %485 = vmatprep.subr.bf16.mxu0 0
      %486 = vmatpush1.bf16.msra.mxu0 0
      %487 = vmatprep.subr.bf16.mxu0 0
      %488 = vmatpush1.bf16.msra.mxu0 0
      %489 = vmatprep.subr.bf16.mxu0 0
      %490 = vmatpush1.bf16.msra.mxu0 0
      %491 = vmatprep.subr.bf16.mxu0 0
      %492 = vmatpush1.bf16.msra.mxu0 0
      %493 = vmatprep.subr.bf16.mxu0 0
      %494 = vmatpush1.bf16.msra.mxu0 0
      %495 = vmatprep.subr.bf16.mxu0 0
      %496 = vmatpush1.bf16.msra.mxu0 0
      %497 = vmatprep.subr.bf16.mxu0 0
      %498 = vmatpush1.bf16.msra.mxu0 0
      %499 = vmatprep.subr.bf16.mxu0 0
      %500 = vmatpush1.bf16.msra.mxu0 0
      %501 = vmatprep.subr.bf16.mxu0 0
      %502 = vmatpush1.bf16.msra.mxu0 0
      %503 = vmatprep.mubr.bf16.mxu0 0
      %504 = vmatmul.mubr.bf16.gmra.mrb[0].mxu0 %v417
      %v505 = vpop.f32.mrb[0].mxu0
      %v506 = vadd.f32 %v457, %v505
      %v507 = vpop.f32.mrb[0].mxu0
      %v508 = vpop.f32.mrb[0].mxu0
      %v509 = vadd.f32 %v460, %v508
      %v510 = vpop.f32.mrb[0].mxu0
      %511 = vmatprep.mubr.bf16.mxu0 0
      %512 = vmatmul.mubr.bf16.gmra.mrb[0].mxu0 %v420
      %v513 = vpop.f32.mrb[0].mxu0
      %v514 = vadd.f32 %v465, %v513
      %v515 = vpop.f32.mrb[0].mxu0
      %v516 = vpop.f32.mrb[0].mxu0
      %v517 = vadd.f32 %v468, %v516
      %v518 = vpop.f32.mrb[0].mxu0
      %519 = vdwg.mxu0
      %v520 = vld [vmem:[%s2] sm:$0x1]
      %v522 = vlaneseq
      %v523 = vshrl.u32 %v522, 7
      %v524 = vsub.s32 0, %v523
      %v525 = vrot.slane %v520, %v524
      %v527 = vmul.f32 %v506, %v525
      %v528 = vmul.f32 %v509, %v525
      %v529 = vmul.f32 %v514, %v525
      %v530 = vmul.f32 %v517, %v525
      %v531 = vld [vmem:[%s3] sm:$0x1]
      %v533 = vlaneseq
      %v534 = vshrl.u32 %v533, 7
      %v535 = vsub.s32 0, %v534
      %v536 = vrot.slane %v531, %v535
      %v538 = vadd.f32 %v527, %v536
      %v539 = vadd.f32 %v528, %v536
      %v540 = vadd.f32 %v529, %v536
      %v541 = vadd.f32 %v530, %v536
      %s542 = sld [smem:[#allocation2]]
      %vm543 = vcmp.gt.f32.partialorder %v538, 0.0
      %vm544 = vcmp.gt.f32.partialorder %v539, 0.0
      %vm545 = vcmp.gt.f32.partialorder %v540, 0.0
      %vm546 = vcmp.gt.f32.partialorder %v541, 0.0
      %v547 = vstv %s542
      %v548 = vmul.f32 %v547, %v538
      %v549 = vmul.f32 %v547, %v539
      %v550 = vmul.f32 %v547, %v540
      %v551 = vmul.f32 %v547, %v541
      %v552 = vsel %vm543, %v538, %v548
      %v553 = vsel %vm544, %v539, %v549
      %v554 = vsel %vm545, %v540, %v550
      %v555 = vsel %vm546, %v541, %v551
      %v556 = vpack.c.bf16 %v553, %v552
      %v557 = vpack.c.bf16 %v555, %v554
      %v560 = vunpack.c.l.b16 %v556
      %v561 = vunpack.c.h.b16 %v556
      %v562 = vunpack.c.l.b16 %v557
      %v563 = vunpack.c.h.b16 %v557
      %v564 = vpack.c.b16 %v560, %v560
      %v565 = vpack.c.b16 %v561, %v561
      %v566 = vpack.c.b16 %v562, %v562
      %v567 = vpack.c.b16 %v563, %v563
      %572 = vst [vmem:[%s230] sm:$0xf] %v564
      %573 = vst [vmem:[%s230 + $0x4] sm:$0xf] %v565
      %574 = vst [vmem:[%s230 + $0x8] sm:$0xf] %v566
      %575 = vst [vmem:[%s230 + $0xc] sm:$0xf] %v567
      %s576 = smul.u32 4, %s17
      %p577 = scmp.lt.s32.totalorder %s576, 7
      %s578 = scalar_select %p577, %s576, 7
      %s579 = smul.addr %s578, 4
      %s580 = scalar_lea.vmem %s5, %s579
      // Predicated region
      $region41: #{upsample_forward.3} parent=39 // pred_check
        %p581 = pneg %p145
      $region42: #{upsample_forward.3} parent=39 // pred_check_branch
        %583 = sbr.rel (%p581) target = $region44
      $region43: #{upsample_forward.3} parent=39 // pred_region
        %s584 = smul.u32 4, %s17
      $region44: #{upsample_forward.3} parent=39 // pred_fallthru
        _
    $region40: #{upsample_forward.3} parent=5 // pred_fallthru
      _
    %p585 = scmp.le.s32.totalorder 2, %s12
    // Predicated region
    $region45: #{upsample_forward.3} parent=5 // pred_check
      %p586 = pneg %p585
    $region46: #{upsample_forward.3} parent=5 // pred_check_branch
      %588 = sbr.rel (%p586) target = $region48
    $region47: #{upsample_forward.3} parent=5 // pred_region
      %s589 = ssub.s32 %s12, 2
      // Predicated region
      $region49: #{upsample_forward.3} parent=47 // pred_check
        %p590 = pneg %p151
      $region50: #{upsample_forward.3} parent=47 // pred_check_branch
        %592 = sbr.rel (%p590) target = $region52
      $region51: #{upsample_forward.3} parent=47 // pred_region
        %s593 = smul.u32 4, %s18
        %p594 = scmp.lt.s32.totalorder %s593, 7
        %s595 = scalar_select %p594, %s593, 7
        %s596 = smul.addr %s595, 4
        %s597 = scalar_lea.vmem %s5, %s596
      $region52: #{upsample_forward.3} parent=47 // pred_fallthru
        _
    $region48: #{upsample_forward.3} parent=5 // pred_fallthru
      _
  $region6: #{upsample_forward.3} parent=0 // loop_footer
    %s16 = sadd.s32 1, %s12
  $region7: #{upsample_forward.3} parent=0 // loop_footer_branch
    %11 = sbr.rel target = $region3
  $region8: #{upsample_forward.3} parent=0 // loop_exit
    _

</llo_original>
